<compile_context>
chip_gen: v7x
topology: tpu7x:2x2x1
jax: 0.10.0
libtpu: 0.0.40
codegen_flags: <defaults>
</compile_context>

<pallas_src>
import functools

import jax
import jax.numpy as jnp
from jax import lax
from jax.experimental import pallas as pl
from jax.experimental.pallas import tpu as pltpu

LANE = 128
SUBLANE = 8
TILE_CAP = 512          # rows per batch tile (sublane multiple); ~85% HBM roofline
UNROLL_MAX_LAYERS = 8   # static unroll up to this many linear layers


def _round_up(x, m):
    return (x + m - 1) // m * m


def make_mlp_kernel(num_layers):
    """Kernel args:
         x_ref   (TM, P)    f32 activation tile
         w_ref   (L, P, P)  bf16 weights, pre-transposed to (in, out)
         b_ref   (L, 1, P)  f32 biases
         out_ref (TM, P)    f32
       Hidden layers get ReLU; the last layer does not."""

    def layer(h, w, b, relu):
        # bf16 MXU inputs, f32 accumulation, f32 epilogue (bias + ReLU).
        acc = jnp.dot(h.astype(w.dtype), w, preferred_element_type=jnp.float32)
        acc = acc + b
        return jnp.maximum(acc, 0.0) if relu else acc

    def kernel(x_ref, w_ref, b_ref, out_ref):
        h = x_ref[...]
        if num_layers <= UNROLL_MAX_LAYERS:
            # Small L: full unroll (review: the right choice at L=4).
            for i in range(num_layers):
                h = layer(h, w_ref[i], b_ref[i], i < num_layers - 1)
        else:
            # Deep stacks (not exercised at the shipped L=4): keep code size
            # and vreg live ranges bounded with a fori_loop + dynamic index.
            def body(i, h):
                return layer(h, w_ref[i], b_ref[i], True)
            h = lax.fori_loop(0, num_layers - 1, body, h)
            h = layer(h, w_ref[num_layers - 1], b_ref[num_layers - 1], False)
        out_ref[...] = h

    return kernel


def pack_params(weights, biases, feat_pad=LANE, weight_dtype=jnp.bfloat16):
    """One-time wrapper-side layout work: transpose each weight to
    (in_features, out_features), zero-pad every feature dim to `feat_pad`,
    cast weights to bf16 (MXU-native), and stack into single slabs."""
    L = len(weights)
    w_packed = jnp.zeros((L, feat_pad, feat_pad), weight_dtype)
    b_packed = jnp.zeros((L, 1, feat_pad), jnp.float32)
    for i, (w, b) in enumerate(zip(weights, biases)):
        out_f, in_f = w.shape
        w_packed = w_packed.at[i, :in_f, :out_f].set(w.T.astype(weight_dtype))
        b_packed = b_packed.at[i, 0, :out_f].set(b.astype(jnp.float32))
    return w_packed, b_packed


def _param_spec(shape, single_buffer):
    index_map = lambda i: (0,) * len(shape)
    if single_buffer:
        # Constant index_map -> slab is DMA'd once and stays resident; a
        # second pipeline buffer would be pure VMEM waste at scale.
        return pl.BlockSpec(shape, index_map, pipeline_mode=pl.Buffered(1))
    return pl.BlockSpec(shape, index_map)


@functools.partial(jax.jit,
                   static_argnames=("output_size", "single_buffer_params"))
def mlp_forward(x, w_packed, b_packed, output_size, single_buffer_params=True):
    """x: (batch, input_size) f32. Returns (batch, output_size) f32."""
    batch, in_f = x.shape
    L, P, _ = w_packed.shape

    # Batch tiling: aim for ~batch/2 rows per tile so a multi-tile batch gets
    # an even number of "parallel" tiles (v7x dual-TC sharding), capped at
    # 512 rows to amortize the ~0.35 us/grid-step overhead.
    tm = min(_round_up(max((batch + 1) // 2, 1), SUBLANE), TILE_CAP)
    pad_batch = _round_up(batch, tm)
    grid = (pad_batch // tm,)

    # Zero-pad activations once (lanes -> 128, sublanes -> tile multiple);
    # padded lanes stay exactly 0 through matmul+bias+ReLU, sliced off at end.
    x_pad = jnp.zeros((pad_batch, P), jnp.float32)
    x_pad = x_pad.at[:batch, :in_f].set(x.astype(jnp.float32))

    w_bytes = w_packed.size * w_packed.dtype.itemsize
    b_bytes = b_packed.size * b_packed.dtype.itemsize
    act_bytes = 2 * 2 * tm * P * 4           # in + out tiles, double-buffered
    # Explicit scoped-VMEM budget: v5e defaults to 16 MiB scoped even though
    # physical VMEM is 128 MiB; stay well under v7x's 64 MiB physical.
    vmem_limit = int(min(max(2 * (w_bytes + b_bytes + act_bytes) + (4 << 20),
                             32 << 20),
                         56 << 20))

    flops = 2 * pad_batch * P * P * L         # padded FLOPs -- advisory only
    bytes_accessed = x_pad.size * 4 + w_bytes + b_bytes + pad_batch * P * 4

    out_pad = pl.pallas_call(
        make_mlp_kernel(L),
        grid=grid,
        in_specs=[
            pl.BlockSpec((tm, P), lambda i: (i, 0)),        # activation tile
            _param_spec((L, P, P), single_buffer_params),   # weights resident
            _param_spec((L, 1, P), single_buffer_params),   # biases resident
        ],
        out_specs=pl.BlockSpec((tm, P), lambda i: (i, 0)),  # lane-dense store
        out_shape=jax.ShapeDtypeStruct((pad_batch, P), jnp.float32),
        compiler_params=pltpu.CompilerParams(
            dimension_semantics=("parallel",),
            vmem_limit_bytes=vmem_limit),
        cost_estimate=pl.CostEstimate(
            flops=flops, transcendentals=0, bytes_accessed=bytes_accessed),
    )(x_pad, w_packed, b_packed)

    return out_pad[:batch, :output_size]


def init_params(key, input_size, hidden_size, hidden_count, output_size):
    """Deterministic synthetic init mirroring the nn.Module layer shapes
    (PyTorch convention: weight is (out_features, in_features))."""
    sizes = [(hidden_size, input_size)]
    for _ in range(hidden_count):
        sizes.append((hidden_size, hidden_size))
    sizes.append((output_size, hidden_size))

    weights, biases = [], []
    for (out_f, in_f) in sizes:
        key, kw, kb = jax.random.split(key, 3)
        bound = 1.0 / jnp.sqrt(in_f)  # nn.Linear default uniform bound
        weights.append(jax.random.uniform(kw, (out_f, in_f), jnp.float32,
                                          minval=-bound, maxval=bound))
        biases.append(jax.random.uniform(kb, (out_f,), jnp.float32,
                                         minval=-bound, maxval=bound))
    return weights, biases


def _reference(x, weights, biases, emulate_bf16):
    """Pure-JAX reference of the PyTorch forward; optionally emulates the
    kernel's bf16-input / f32-accumulate matmul."""
    h = x
    for i, (w, b) in enumerate(zip(weights, biases)):
        if emulate_bf16:
            hh = h.astype(jnp.bfloat16).astype(jnp.float32)
            ww = w.astype(jnp.bfloat16).astype(jnp.float32)
        else:
            hh, ww = h, w
        h = hh @ ww.T + b
        if i < len(weights) - 1:
            h = jnp.maximum(h, 0.0)
    return h


if __name__ == "__main__":
    input_size, hidden_size, hidden_count, output_size = 16, 32, 2, 8
    batch = 8

    key = jax.random.PRNGKey(0)
    key, kx = jax.random.split(key)
    x = jax.random.normal(kx, (batch, input_size), jnp.float32)

    weights, biases = init_params(key, input_size, hidden_size,
                                  hidden_count, output_size)

    # One-time layout plumbing outside the kernel (transpose, pad, bf16 cast).
    w_packed, b_packed = pack_params(weights, biases)

    try:
        out = mlp_forward(x, w_packed, b_packed,
                          output_size=output_size, single_buffer_params=True)
        out = jax.block_until_ready(out)
    except Exception:
        # Fallback for JAX builds without pallas_call-level pl.Buffered
        # support: identical numerics, default double-buffered param slabs.
        out = mlp_forward(x, w_packed, b_packed,
                          output_size=output_size, single_buffer_params=False)
        out = jax.block_until_ready(out)

    assert out.shape == (batch, output_size)

    # Tight check vs a reference that emulates the kernel's bf16-input matmul.
    ref_bf16 = _reference(x, weights, biases, emulate_bf16=True)
    assert jnp.allclose(out, ref_bf16, atol=1e-2, rtol=1e-2), \
        "mismatch vs bf16-emulated reference"

    # Loose check vs the original f32 PyTorch-equivalent forward.
    ref_f32 = _reference(x, weights, biases, emulate_bf16=False)
    assert jnp.allclose(out, ref_f32, atol=5e-2, rtol=5e-2), \
        "mismatch vs f32 reference"

    print("KERNEL_OK")
</pallas_src>

<mosaic_0001>
module attributes {stable_mosaic.version = 11 : i64} {
  func.func @kernel(%arg0: i32, %arg1: memref<8x128xf32, #tpu.memory_space<vmem>>, %arg2: memref<4x128x128xbf16, #tpu.memory_space<vmem>>, %arg3: memref<4x1x128xf32, #tpu.memory_space<vmem>>, %arg4: memref<8x128xf32, #tpu.memory_space<vmem>>) attributes {dimension_semantics = [#tpu.dimension_semantics<parallel>], iteration_bounds = array<i64: 1>, scalar_prefetch = 0 : i64, scratch_operands = 0 : i64, tpu.core_type = #tpu.core_type<tc>, window_params = [{transform_indices = @transform_0, window_bounds = array<i64: 8, 128>}, {pipeline_mode = #tpu.pipeline_mode<synchronous>, transform_indices = @transform_1, window_bounds = array<i64: 4, 128, 128>}, {pipeline_mode = #tpu.pipeline_mode<synchronous>, transform_indices = @transform_2, window_bounds = array<i64: 4, 1, 128>}, {transform_indices = @transform_3, window_bounds = array<i64: 8, 128>}]} {
    %c0 = arith.constant 0 : index
    %c0_0 = arith.constant 0 : index
    %0 = vector.load %arg1[%c0, %c0_0] : memref<8x128xf32, #tpu.memory_space<vmem>>, vector<8x128xf32>
    %c0_1 = arith.constant 0 : index
    %c0_2 = arith.constant 0 : index
    %c0_3 = arith.constant 0 : index
    %1 = vector.load %arg2[%c0_1, %c0_2, %c0_3] : memref<4x128x128xbf16, #tpu.memory_space<vmem>>, vector<1x128x128xbf16>
    %2 = vector.shape_cast %1 : vector<1x128x128xbf16> to vector<128x128xbf16>
    %c0_4 = arith.constant 0 : index
    %c0_5 = arith.constant 0 : index
    %c0_6 = arith.constant 0 : index
    %3 = vector.load %arg3[%c0_4, %c0_5, %c0_6] : memref<4x1x128xf32, #tpu.memory_space<vmem>>, vector<1x1x128xf32>
    %4 = vector.shape_cast %3 : vector<1x1x128xf32> to vector<1x128xf32>
    %5 = arith.truncf %0 : vector<8x128xf32> to vector<8x128xbf16>
    %cst = arith.constant dense<0.000000e+00> : vector<8x128xf32>
    %6 = tpu.matmul %5, %2, %cst {dimension_numbers = #tpu.dot_dimension_numbers<[1], [0], [0], [1], [0, 0, 1, 1], [], []>} : vector<8x128xbf16>, vector<128x128xbf16>, vector<8x128xf32> -> vector<8x128xf32>
    %7 = vector.broadcast %4 : vector<1x128xf32> to vector<8x128xf32>
    %8 = arith.addf %6, %7 : vector<8x128xf32>
    %cst_7 = arith.constant 0.000000e+00 : f32
    %9 = vector.broadcast %cst_7 : f32 to vector<8x128xf32>
    %10 = arith.maximumf %8, %9 : vector<8x128xf32>
    %c1 = arith.constant 1 : index
    %c0_8 = arith.constant 0 : index
    %c0_9 = arith.constant 0 : index
    %11 = vector.load %arg2[%c1, %c0_8, %c0_9] : memref<4x128x128xbf16, #tpu.memory_space<vmem>>, vector<1x128x128xbf16>
    %12 = vector.shape_cast %11 : vector<1x128x128xbf16> to vector<128x128xbf16>
    %c1_10 = arith.constant 1 : index
    %c0_11 = arith.constant 0 : index
    %c0_12 = arith.constant 0 : index
    %13 = vector.load %arg3[%c1_10, %c0_11, %c0_12] : memref<4x1x128xf32, #tpu.memory_space<vmem>>, vector<1x1x128xf32>
    %14 = vector.shape_cast %13 : vector<1x1x128xf32> to vector<1x128xf32>
    %15 = arith.truncf %10 : vector<8x128xf32> to vector<8x128xbf16>
    %cst_13 = arith.constant dense<0.000000e+00> : vector<8x128xf32>
    %16 = tpu.matmul %15, %12, %cst_13 {dimension_numbers = #tpu.dot_dimension_numbers<[1], [0], [0], [1], [0, 0, 1, 1], [], []>} : vector<8x128xbf16>, vector<128x128xbf16>, vector<8x128xf32> -> vector<8x128xf32>
    %17 = vector.broadcast %14 : vector<1x128xf32> to vector<8x128xf32>
    %18 = arith.addf %16, %17 : vector<8x128xf32>
    %cst_14 = arith.constant 0.000000e+00 : f32
    %19 = vector.broadcast %cst_14 : f32 to vector<8x128xf32>
    %20 = arith.maximumf %18, %19 : vector<8x128xf32>
    %c2 = arith.constant 2 : index
    %c0_15 = arith.constant 0 : index
    %c0_16 = arith.constant 0 : index
    %21 = vector.load %arg2[%c2, %c0_15, %c0_16] : memref<4x128x128xbf16, #tpu.memory_space<vmem>>, vector<1x128x128xbf16>
    %22 = vector.shape_cast %21 : vector<1x128x128xbf16> to vector<128x128xbf16>
    %c2_17 = arith.constant 2 : index
    %c0_18 = arith.constant 0 : index
    %c0_19 = arith.constant 0 : index
    %23 = vector.load %arg3[%c2_17, %c0_18, %c0_19] : memref<4x1x128xf32, #tpu.memory_space<vmem>>, vector<1x1x128xf32>
    %24 = vector.shape_cast %23 : vector<1x1x128xf32> to vector<1x128xf32>
    %25 = arith.truncf %20 : vector<8x128xf32> to vector<8x128xbf16>
    %cst_20 = arith.constant dense<0.000000e+00> : vector<8x128xf32>
    %26 = tpu.matmul %25, %22, %cst_20 {dimension_numbers = #tpu.dot_dimension_numbers<[1], [0], [0], [1], [0, 0, 1, 1], [], []>} : vector<8x128xbf16>, vector<128x128xbf16>, vector<8x128xf32> -> vector<8x128xf32>
    %27 = vector.broadcast %24 : vector<1x128xf32> to vector<8x128xf32>
    %28 = arith.addf %26, %27 : vector<8x128xf32>
    %cst_21 = arith.constant 0.000000e+00 : f32
    %29 = vector.broadcast %cst_21 : f32 to vector<8x128xf32>
    %30 = arith.maximumf %28, %29 : vector<8x128xf32>
    %c3 = arith.constant 3 : index
    %c0_22 = arith.constant 0 : index
    %c0_23 = arith.constant 0 : index
    %31 = vector.load %arg2[%c3, %c0_22, %c0_23] : memref<4x128x128xbf16, #tpu.memory_space<vmem>>, vector<1x128x128xbf16>
    %32 = vector.shape_cast %31 : vector<1x128x128xbf16> to vector<128x128xbf16>
    %c3_24 = arith.constant 3 : index
    %c0_25 = arith.constant 0 : index
    %c0_26 = arith.constant 0 : index
    %33 = vector.load %arg3[%c3_24, %c0_25, %c0_26] : memref<4x1x128xf32, #tpu.memory_space<vmem>>, vector<1x1x128xf32>
    %34 = vector.shape_cast %33 : vector<1x1x128xf32> to vector<1x128xf32>
    %35 = arith.truncf %30 : vector<8x128xf32> to vector<8x128xbf16>
    %cst_27 = arith.constant dense<0.000000e+00> : vector<8x128xf32>
    %36 = tpu.matmul %35, %32, %cst_27 {dimension_numbers = #tpu.dot_dimension_numbers<[1], [0], [0], [1], [0, 0, 1, 1], [], []>} : vector<8x128xbf16>, vector<128x128xbf16>, vector<8x128xf32> -> vector<8x128xf32>
    %37 = vector.broadcast %34 : vector<1x128xf32> to vector<8x128xf32>
    %38 = arith.addf %36, %37 : vector<8x128xf32>
    %c0_28 = arith.constant 0 : index
    %c0_29 = arith.constant 0 : index
    %39 = vector.load %arg4[%c0_28, %c0_29] : memref<8x128xf32, #tpu.memory_space<vmem>>, vector<8x128xf32>
    tpu.vector_store %arg4[%c0_28, %c0_29], %38 {strides = array<i32>} : memref<8x128xf32, #tpu.memory_space<vmem>>, vector<8x128xf32>,
    return
  }
  func.func @transform_0(%arg0: i32) -> (i32, i32) {
    %c0_i32 = arith.constant 0 : i32
    %c0_i32_0 = arith.constant 0 : i32
    return %arg0, %c0_i32 : i32, i32
  }
  func.func @transform_1(%arg0: i32) -> (i32, i32, i32) {
    %c0_i32 = arith.constant 0 : i32
    %c0_i32_0 = arith.constant 0 : i32
    %c0_i32_1 = arith.constant 0 : i32
    %c0_i32_2 = arith.constant 0 : i32
    return %c0_i32, %c0_i32_0, %c0_i32_1 : i32, i32, i32
  }
  func.func @transform_2(%arg0: i32) -> (i32, i32, i32) {
    %c0_i32 = arith.constant 0 : i32
    %c0_i32_0 = arith.constant 0 : i32
    %c0_i32_1 = arith.constant 0 : i32
    %c0_i32_2 = arith.constant 0 : i32
    return %c0_i32, %c0_i32_0, %c0_i32_1 : i32, i32, i32
  }
  func.func @transform_3(%arg0: i32) -> (i32, i32) {
    %c0_i32 = arith.constant 0 : i32
    %c0_i32_0 = arith.constant 0 : i32
    return %arg0, %c0_i32 : i32, i32
  }
}

module attributes {stable_mosaic.version = 11 : i64} {
  func.func @kernel(%arg0: i32, %arg1: memref<8x128xf32, #tpu.memory_space<vmem>>, %arg2: memref<4x128x128xbf16, #tpu.memory_space<vmem>>, %arg3: memref<4x1x128xf32, #tpu.memory_space<vmem>>, %arg4: memref<8x128xf32, #tpu.memory_space<vmem>>) attributes {dimension_semantics = [#tpu.dimension_semantics<parallel>], iteration_bounds = array<i64: 1>, scalar_prefetch = 0 : i64, scratch_operands = 0 : i64, tpu.core_type = #tpu.core_type<tc>, window_params = [{transform_indices = @transform_0, window_bounds = array<i64: 8, 128>}, {pipeline_mode = #tpu.pipeline_mode<synchronous>, transform_indices = @transform_1, window_bounds = array<i64: 4, 128, 128>}, {pipeline_mode = #tpu.pipeline_mode<synchronous>, transform_indices = @transform_2, window_bounds = array<i64: 4, 1, 128>}, {transform_indices = @transform_3, window_bounds = array<i64: 8, 128>}]} {
    %c0 = arith.constant 0 : index
    %c0_0 = arith.constant 0 : index
    %0 = vector.load %arg1[%c0, %c0_0] : memref<8x128xf32, #tpu.memory_space<vmem>>, vector<8x128xf32>
    %c0_1 = arith.constant 0 : index
    %c0_2 = arith.constant 0 : index
    %c0_3 = arith.constant 0 : index
    %1 = vector.load %arg2[%c0_1, %c0_2, %c0_3] : memref<4x128x128xbf16, #tpu.memory_space<vmem>>, vector<1x128x128xbf16>
    %2 = vector.shape_cast %1 : vector<1x128x128xbf16> to vector<128x128xbf16>
    %c0_4 = arith.constant 0 : index
    %c0_5 = arith.constant 0 : index
    %c0_6 = arith.constant 0 : index
    %3 = vector.load %arg3[%c0_4, %c0_5, %c0_6] : memref<4x1x128xf32, #tpu.memory_space<vmem>>, vector<1x1x128xf32>
    %4 = vector.shape_cast %3 : vector<1x1x128xf32> to vector<1x128xf32>
    %5 = arith.truncf %0 : vector<8x128xf32> to vector<8x128xbf16>
    %cst = arith.constant dense<0.000000e+00> : vector<8x128xf32>
    %6 = tpu.matmul %5, %2, %cst {dimension_numbers = #tpu.dot_dimension_numbers<[1], [0], [0], [1], [0, 0, 1, 1], [], []>} : vector<8x128xbf16>, vector<128x128xbf16>, vector<8x128xf32> -> vector<8x128xf32>
    %7 = vector.broadcast %4 : vector<1x128xf32> to vector<8x128xf32>
    %8 = arith.addf %6, %7 : vector<8x128xf32>
    %cst_7 = arith.constant 0.000000e+00 : f32
    %9 = vector.broadcast %cst_7 : f32 to vector<8x128xf32>
    %10 = arith.maximumf %8, %9 : vector<8x128xf32>
    %c1 = arith.constant 1 : index
    %c0_8 = arith.constant 0 : index
    %c0_9 = arith.constant 0 : index
    %11 = vector.load %arg2[%c1, %c0_8, %c0_9] : memref<4x128x128xbf16, #tpu.memory_space<vmem>>, vector<1x128x128xbf16>
    %12 = vector.shape_cast %11 : vector<1x128x128xbf16> to vector<128x128xbf16>
    %c1_10 = arith.constant 1 : index
    %c0_11 = arith.constant 0 : index
    %c0_12 = arith.constant 0 : index
    %13 = vector.load %arg3[%c1_10, %c0_11, %c0_12] : memref<4x1x128xf32, #tpu.memory_space<vmem>>, vector<1x1x128xf32>
    %14 = vector.shape_cast %13 : vector<1x1x128xf32> to vector<1x128xf32>
    %15 = arith.truncf %10 : vector<8x128xf32> to vector<8x128xbf16>
    %cst_13 = arith.constant dense<0.000000e+00> : vector<8x128xf32>
    %16 = tpu.matmul %15, %12, %cst_13 {dimension_numbers = #tpu.dot_dimension_numbers<[1], [0], [0], [1], [0, 0, 1, 1], [], []>} : vector<8x128xbf16>, vector<128x128xbf16>, vector<8x128xf32> -> vector<8x128xf32>
    %17 = vector.broadcast %14 : vector<1x128xf32> to vector<8x128xf32>
    %18 = arith.addf %16, %17 : vector<8x128xf32>
    %cst_14 = arith.constant 0.000000e+00 : f32
    %19 = vector.broadcast %cst_14 : f32 to vector<8x128xf32>
    %20 = arith.maximumf %18, %19 : vector<8x128xf32>
    %c2 = arith.constant 2 : index
    %c0_15 = arith.constant 0 : index
    %c0_16 = arith.constant 0 : index
    %21 = vector.load %arg2[%c2, %c0_15, %c0_16] : memref<4x128x128xbf16, #tpu.memory_space<vmem>>, vector<1x128x128xbf16>
    %22 = vector.shape_cast %21 : vector<1x128x128xbf16> to vector<128x128xbf16>
    %c2_17 = arith.constant 2 : index
    %c0_18 = arith.constant 0 : index
    %c0_19 = arith.constant 0 : index
    %23 = vector.load %arg3[%c2_17, %c0_18, %c0_19] : memref<4x1x128xf32, #tpu.memory_space<vmem>>, vector<1x1x128xf32>
    %24 = vector.shape_cast %23 : vector<1x1x128xf32> to vector<1x128xf32>
    %25 = arith.truncf %20 : vector<8x128xf32> to vector<8x128xbf16>
    %cst_20 = arith.constant dense<0.000000e+00> : vector<8x128xf32>
    %26 = tpu.matmul %25, %22, %cst_20 {dimension_numbers = #tpu.dot_dimension_numbers<[1], [0], [0], [1], [0, 0, 1, 1], [], []>} : vector<8x128xbf16>, vector<128x128xbf16>, vector<8x128xf32> -> vector<8x128xf32>
    %27 = vector.broadcast %24 : vector<1x128xf32> to vector<8x128xf32>
    %28 = arith.addf %26, %27 : vector<8x128xf32>
    %cst_21 = arith.constant 0.000000e+00 : f32
    %29 = vector.broadcast %cst_21 : f32 to vector<8x128xf32>
    %30 = arith.maximumf %28, %29 : vector<8x128xf32>
    %c3 = arith.constant 3 : index
    %c0_22 = arith.constant 0 : index
    %c0_23 = arith.constant 0 : index
    %31 = vector.load %arg2[%c3, %c0_22, %c0_23] : memref<4x128x128xbf16, #tpu.memory_space<vmem>>, vector<1x128x128xbf16>
    %32 = vector.shape_cast %31 : vector<1x128x128xbf16> to vector<128x128xbf16>
    %c3_24 = arith.constant 3 : index
    %c0_25 = arith.constant 0 : index
    %c0_26 = arith.constant 0 : index
    %33 = vector.load %arg3[%c3_24, %c0_25, %c0_26] : memref<4x1x128xf32, #tpu.memory_space<vmem>>, vector<1x1x128xf32>
    %34 = vector.shape_cast %33 : vector<1x1x128xf32> to vector<1x128xf32>
    %35 = arith.truncf %30 : vector<8x128xf32> to vector<8x128xbf16>
    %cst_27 = arith.constant dense<0.000000e+00> : vector<8x128xf32>
    %36 = tpu.matmul %35, %32, %cst_27 {dimension_numbers = #tpu.dot_dimension_numbers<[1], [0], [0], [1], [0, 0, 1, 1], [], []>} : vector<8x128xbf16>, vector<128x128xbf16>, vector<8x128xf32> -> vector<8x128xf32>
    %37 = vector.broadcast %34 : vector<1x128xf32> to vector<8x128xf32>
    %38 = arith.addf %36, %37 : vector<8x128xf32>
    %c0_28 = arith.constant 0 : index
    %c0_29 = arith.constant 0 : index
    %39 = vector.load %arg4[%c0_28, %c0_29] : memref<8x128xf32, #tpu.memory_space<vmem>>, vector<8x128xf32>
    tpu.vector_store %arg4[%c0_28, %c0_29], %38 {strides = array<i32>} : memref<8x128xf32, #tpu.memory_space<vmem>>, vector<8x128xf32>,
    return
  }
  func.func @transform_0(%arg0: i32) -> (i32, i32) {
    %c0_i32 = arith.constant 0 : i32
    %c0_i32_0 = arith.constant 0 : i32
    return %arg0, %c0_i32 : i32, i32
  }
  func.func @transform_1(%arg0: i32) -> (i32, i32, i32) {
    %c0_i32 = arith.constant 0 : i32
    %c0_i32_0 = arith.constant 0 : i32
    %c0_i32_1 = arith.constant 0 : i32
    %c0_i32_2 = arith.constant 0 : i32
    return %c0_i32, %c0_i32_0, %c0_i32_1 : i32, i32, i32
  }
  func.func @transform_2(%arg0: i32) -> (i32, i32, i32) {
    %c0_i32 = arith.constant 0 : i32
    %c0_i32_0 = arith.constant 0 : i32
    %c0_i32_1 = arith.constant 0 : i32
    %c0_i32_2 = arith.constant 0 : i32
    return %c0_i32, %c0_i32_0, %c0_i32_1 : i32, i32, i32
  }
  func.func @transform_3(%arg0: i32) -> (i32, i32) {
    %c0_i32 = arith.constant 0 : i32
    %c0_i32_0 = arith.constant 0 : i32
    return %arg0, %c0_i32 : i32, i32
  }
}

</mosaic_0001>

<llo_original>
// kernel: mlp_forward.1
$region0: #{mlp_forward.1}
  #allocation0 [shape = 'u32[]', space=smem, size = 0x4, offset = 0x4, fixed_abs, tag = 'smem constant byte address 0x4 - core index']
  #allocation1 [shape = 'u32[144,128]{1,0:T(1,128)}', space=vmem, size = 0x12000, scoped, tag = 'internal scratch']
  %s0 = inlined_call_operand.vmem [shape: f32[8,128], index: 0, kind: input, shape index: {}]
  %s1 = inlined_call_operand.hbm [shape: bf16[4,128,128], index: 1, kind: input, shape index: {}]
  %s2 = inlined_call_operand.vmem [shape: f32[4,1,128], index: 2, kind: input, shape index: {}]
  %s3 = inlined_call_operand.hbm [shape: f32[8,128], index: 3, kind: output, shape index: {}]
  %s4 = sld [smem:[#allocation0]]
  $region26: #{mlp_forward.1} parent=0
    _
  %s6 = ssub.s32 1, %s4
  %s7 = scalar_select 0, %s6, %s4
  $region1: #{mlp_forward.1} parent=0
    #allocation2 [shape = 'u8[131072]{0}', space=vmem, size = 0x20000, scoped, tag = 'input window, operand 1, single buffered']
    #allocation3 [shape = 's32[1]{0}', space=sflag, size = 0x4, scoped, tag = 'scoped memory for mlp_forward.1']
    #allocation4 [shape = 's32[1]{0}', space=sflag, size = 0x4, scoped, tag = 'scoped memory for mlp_forward.1']
    #allocation5 [shape = 'u8[4096]{0}', space=vmem, size = 0x1000, scoped, tag = 'output window, operand 0, single buffered']
    %8 = vsyncpa [#allocation3], 0
    %9 = vsyncpa [#allocation4], 0
    // Predicated region
    $region2: #{mlp_forward.1} parent=1 // pred_check
      _
    $region3: #{mlp_forward.1} parent=1 // pred_check_branch
      %11 = sbr.rel (0) target = $region5
    $region4: #{mlp_forward.1} parent=1 // pred_region
      _
    $region5: #{mlp_forward.1} parent=1 // pred_fallthru
      _
    // Predicated region
    $region6: #{mlp_forward.1} parent=1 // pred_check
      _
    $region7: #{mlp_forward.1} parent=1 // pred_check_branch
      %13 = sbr.rel (0) target = $region9
    $region8: #{mlp_forward.1} parent=1 // pred_region
      %s15 = ssub.s32 4096, 4096
      %16 = vsyncadd [#allocation3], %s15
      %s17 = sshll.u32 [#allocation2], 4
      %s18 = int_to_ptr.vmem [resolvable:$true] %s17
      %23 = dma.hbm_to_vmem [thread:$0]  %s1, 4096, %s18, [#allocation3], 64, 64, 4
    $region9: #{mlp_forward.1} parent=1 // pred_fallthru
      _
    // Predicated region
    $region10: #{mlp_forward.1} parent=1 // pred_check
      _
    $region11: #{mlp_forward.1} parent=1 // pred_check_branch
      %25 = sbr.rel (0) target = $region13
    $region12: #{mlp_forward.1} parent=1 // pred_region
      _
    $region13: #{mlp_forward.1} parent=1 // pred_fallthru
      _
    // Predicated region
    $region14: #{mlp_forward.1} parent=1 // pred_check
      _
    $region15: #{mlp_forward.1} parent=1 // pred_check_branch
      %27 = sbr.rel (0) target = $region17
    $region16: #{mlp_forward.1} parent=1 // pred_region
      %28 = dma.done [#allocation3], 4096
    $region17: #{mlp_forward.1} parent=1 // pred_fallthru
      _
    %v30 = vld [vmem:[%s0] sm:$0xff]
    %v31 = vld [vmem:[#allocation2] sm:$0xf]
    %v32 = vld [vmem:[#allocation2 + $0x4] sm:$0xf]
    %v33 = vld [vmem:[#allocation2 + $0x8] sm:$0xf]
    %v34 = vld [vmem:[#allocation2 + $0xc] sm:$0xf]
    %v35 = vld [vmem:[#allocation2 + $0x10] sm:$0xf]
    %v36 = vld [vmem:[#allocation2 + $0x14] sm:$0xf]
    %v37 = vld [vmem:[#allocation2 + $0x18] sm:$0xf]
    %v38 = vld [vmem:[#allocation2 + $0x1c] sm:$0xf]
    %v39 = vld [vmem:[#allocation2 + $0x20] sm:$0xf]
    %v40 = vld [vmem:[#allocation2 + $0x24] sm:$0xf]
    %v41 = vld [vmem:[#allocation2 + $0x28] sm:$0xf]
    %v42 = vld [vmem:[#allocation2 + $0x2c] sm:$0xf]
    %v43 = vld [vmem:[#allocation2 + $0x30] sm:$0xf]
    %v44 = vld [vmem:[#allocation2 + $0x34] sm:$0xf]
    %v45 = vld [vmem:[#allocation2 + $0x38] sm:$0xf]
    %v46 = vld [vmem:[#allocation2 + $0x3c] sm:$0xf]
    %v47 = vld [vmem:[%s2] sm:$0x1]
    %v48 = vpack.c.bf16 %v30, %v30
    %v50 = vlaneseq
    %v51 = vshrl.u32 %v50, 7
    %v52 = vsub.s32 0, %v51
    %v53 = vrot.slane %v47, %v52
    %v71 = vunpack.c.l.b16 %v31
    %v72 = vunpack.c.l.b16 %v32
    %v73 = vunpack.c.l.b16 %v33
    %v74 = vunpack.c.l.b16 %v34
    %v75 = vunpack.c.l.b16 %v35
    %v76 = vunpack.c.l.b16 %v36
    %v77 = vunpack.c.l.b16 %v37
    %v78 = vunpack.c.l.b16 %v38
    %v79 = vunpack.c.l.b16 %v39
    %v80 = vunpack.c.l.b16 %v40
    %v81 = vunpack.c.l.b16 %v41
    %v82 = vunpack.c.l.b16 %v42
    %v83 = vunpack.c.l.b16 %v43
    %v84 = vunpack.c.l.b16 %v44
    %v85 = vunpack.c.l.b16 %v45
    %v86 = vunpack.c.l.b16 %v46
    %v87 = vpack.c.b16 %v72, %v71
    %v88 = vpack.c.b16 %v74, %v73
    %v89 = vpack.c.b16 %v76, %v75
    %v90 = vpack.c.b16 %v78, %v77
    %v91 = vpack.c.b16 %v80, %v79
    %v92 = vpack.c.b16 %v82, %v81
    %v93 = vpack.c.b16 %v84, %v83
    %v94 = vpack.c.b16 %v86, %v85
    %103 = vmatprep.subr.bf16.mxu0 0
    %104 = vmatpush1.bf16.msra.mxu0 %v87
    %105 = vmatprep.subr.bf16.mxu0 0
    %106 = vmatpush1.bf16.msra.mxu0 %v88
    %107 = vmatprep.subr.bf16.mxu0 0
    %108 = vmatpush1.bf16.msra.mxu0 %v89
    %109 = vmatprep.subr.bf16.mxu0 0
    %110 = vmatpush1.bf16.msra.mxu0 %v90
    %111 = vmatprep.subr.bf16.mxu0 0
    %112 = vmatpush1.bf16.msra.mxu0 %v91
    %113 = vmatprep.subr.bf16.mxu0 0
    %114 = vmatpush1.bf16.msra.mxu0 %v92
    %115 = vmatprep.subr.bf16.mxu0 0
    %116 = vmatpush1.bf16.msra.mxu0 %v93
    %117 = vmatprep.subr.bf16.mxu0 0
    %118 = vmatpush1.bf16.msra.mxu0 %v94
    %119 = vmatprep.subr.bf16.mxu0 0
    %120 = vmatpush1.bf16.msra.mxu0 0
    %121 = vmatprep.subr.bf16.mxu0 0
    %122 = vmatpush1.bf16.msra.mxu0 0
    %123 = vmatprep.subr.bf16.mxu0 0
    %124 = vmatpush1.bf16.msra.mxu0 0
    %125 = vmatprep.subr.bf16.mxu0 0
    %126 = vmatpush1.bf16.msra.mxu0 0
    %127 = vmatprep.subr.bf16.mxu0 0
    %128 = vmatpush1.bf16.msra.mxu0 0
    %129 = vmatprep.subr.bf16.mxu0 0
    %130 = vmatpush1.bf16.msra.mxu0 0
    %131 = vmatprep.subr.bf16.mxu0 0
    %132 = vmatpush1.bf16.msra.mxu0 0
    %133 = vmatprep.subr.bf16.mxu0 0
    %134 = vmatpush1.bf16.msra.mxu0 0
    %135 = vmatprep.mubr.bf16.mxu0 0
    %136 = vmatmul.mubr.bf16.gmra.mrb[0].mxu0 %v48
    %v137 = vpop.f32.mrb[0].mxu0
    %v138 = vadd.f32 %v53, %v137
    %v139 = vpop.f32.mrb[0].mxu0
    %v140 = vpop.f32.mrb[0].mxu0
    %v141 = vpop.f32.mrb[0].mxu0
    %142 = vdwg.mxu0
    %v143 = vmax.f32 %v138, 0.0
    %s144 = scalar_lea.vmem [#allocation2], 64
    %v145 = vld [vmem:[%s144] sm:$0xf]
    %v146 = vld [vmem:[%s144 + $0x4] sm:$0xf]
    %v147 = vld [vmem:[%s144 + $0x8] sm:$0xf]
    %v148 = vld [vmem:[%s144 + $0xc] sm:$0xf]
    %v149 = vld [vmem:[%s144 + $0x10] sm:$0xf]
    %v150 = vld [vmem:[%s144 + $0x14] sm:$0xf]
    %v151 = vld [vmem:[%s144 + $0x18] sm:$0xf]
    %v152 = vld [vmem:[%s144 + $0x1c] sm:$0xf]
    %v153 = vld [vmem:[%s144 + $0x20] sm:$0xf]
    %v154 = vld [vmem:[%s144 + $0x24] sm:$0xf]
    %v155 = vld [vmem:[%s144 + $0x28] sm:$0xf]
    %v156 = vld [vmem:[%s144 + $0x2c] sm:$0xf]
    %v157 = vld [vmem:[%s144 + $0x30] sm:$0xf]
    %v158 = vld [vmem:[%s144 + $0x34] sm:$0xf]
    %v159 = vld [vmem:[%s144 + $0x38] sm:$0xf]
    %v160 = vld [vmem:[%s144 + $0x3c] sm:$0xf]
    %s161 = scalar_lea.vmem %s2, 1
    %v162 = vld [vmem:[%s161] sm:$0x1]
    %v163 = vpack.c.bf16 %v143, %v143
    %v165 = vlaneseq
    %v166 = vshrl.u32 %v165, 7
    %v167 = vsub.s32 0, %v166
    %v168 = vrot.slane %v162, %v167
    %v186 = vunpack.c.l.b16 %v145
    %v187 = vunpack.c.l.b16 %v146
    %v188 = vunpack.c.l.b16 %v147
    %v189 = vunpack.c.l.b16 %v148
    %v190 = vunpack.c.l.b16 %v149
    %v191 = vunpack.c.l.b16 %v150
    %v192 = vunpack.c.l.b16 %v151
    %v193 = vunpack.c.l.b16 %v152
    %v194 = vunpack.c.l.b16 %v153
    %v195 = vunpack.c.l.b16 %v154
    %v196 = vunpack.c.l.b16 %v155
    %v197 = vunpack.c.l.b16 %v156
    %v198 = vunpack.c.l.b16 %v157
    %v199 = vunpack.c.l.b16 %v158
    %v200 = vunpack.c.l.b16 %v159
    %v201 = vunpack.c.l.b16 %v160
    %v202 = vpack.c.b16 %v187, %v186
    %v203 = vpack.c.b16 %v189, %v188
    %v204 = vpack.c.b16 %v191, %v190
    %v205 = vpack.c.b16 %v193, %v192
    %v206 = vpack.c.b16 %v195, %v194
    %v207 = vpack.c.b16 %v197, %v196
    %v208 = vpack.c.b16 %v199, %v198
    %v209 = vpack.c.b16 %v201, %v200
    %218 = vmatprep.subr.bf16.mxu0 0
    %219 = vmatpush1.bf16.msra.mxu0 %v202
    %220 = vmatprep.subr.bf16.mxu0 0
    %221 = vmatpush1.bf16.msra.mxu0 %v203
    %222 = vmatprep.subr.bf16.mxu0 0
    %223 = vmatpush1.bf16.msra.mxu0 %v204
    %224 = vmatprep.subr.bf16.mxu0 0
    %225 = vmatpush1.bf16.msra.mxu0 %v205
    %226 = vmatprep.subr.bf16.mxu0 0
    %227 = vmatpush1.bf16.msra.mxu0 %v206
    %228 = vmatprep.subr.bf16.mxu0 0
    %229 = vmatpush1.bf16.msra.mxu0 %v207
    %230 = vmatprep.subr.bf16.mxu0 0
    %231 = vmatpush1.bf16.msra.mxu0 %v208
    %232 = vmatprep.subr.bf16.mxu0 0
    %233 = vmatpush1.bf16.msra.mxu0 %v209
    %234 = vmatprep.subr.bf16.mxu0 0
    %235 = vmatpush1.bf16.msra.mxu0 0
    %236 = vmatprep.subr.bf16.mxu0 0
    %237 = vmatpush1.bf16.msra.mxu0 0
    %238 = vmatprep.subr.bf16.mxu0 0
    %239 = vmatpush1.bf16.msra.mxu0 0
    %240 = vmatprep.subr.bf16.mxu0 0
    %241 = vmatpush1.bf16.msra.mxu0 0
    %242 = vmatprep.subr.bf16.mxu0 0
    %243 = vmatpush1.bf16.msra.mxu0 0
    %244 = vmatprep.subr.bf16.mxu0 0
    %245 = vmatpush1.bf16.msra.mxu0 0
    %246 = vmatprep.subr.bf16.mxu0 0
    %247 = vmatpush1.bf16.msra.mxu0 0
    %248 = vmatprep.subr.bf16.mxu0 0
    %249 = vmatpush1.bf16.msra.mxu0 0
    %250 = vmatprep.mubr.bf16.mxu0 0
    %251 = vmatmul.mubr.bf16.gmra.mrb[0].mxu0 %v163
    %v252 = vpop.f32.mrb[0].mxu0
    %v253 = vadd.f32 %v168, %v252
    %v254 = vpop.f32.mrb[0].mxu0
    %v255 = vpop.f32.mrb[0].mxu0
    %v256 = vpop.f32.mrb[0].mxu0
    %257 = vdwg.mxu0
    %v258 = vmax.f32 %v253, 0.0
    %s259 = scalar_lea.vmem [#allocation2], 128
    %v260 = vld [vmem:[%s259] sm:$0xf]
    %v261 = vld [vmem:[%s259 + $0x4] sm:$0xf]
    %v262 = vld [vmem:[%s259 + $0x8] sm:$0xf]
    %v263 = vld [vmem:[%s259 + $0xc] sm:$0xf]
    %v264 = vld [vmem:[%s259 + $0x10] sm:$0xf]
    %v265 = vld [vmem:[%s259 + $0x14] sm:$0xf]
    %v266 = vld [vmem:[%s259 + $0x18] sm:$0xf]
    %v267 = vld [vmem:[%s259 + $0x1c] sm:$0xf]
    %v268 = vld [vmem:[%s259 + $0x20] sm:$0xf]
    %v269 = vld [vmem:[%s259 + $0x24] sm:$0xf]
    %v270 = vld [vmem:[%s259 + $0x28] sm:$0xf]
    %v271 = vld [vmem:[%s259 + $0x2c] sm:$0xf]
    %v272 = vld [vmem:[%s259 + $0x30] sm:$0xf]
    %v273 = vld [vmem:[%s259 + $0x34] sm:$0xf]
    %v274 = vld [vmem:[%s259 + $0x38] sm:$0xf]
    %v275 = vld [vmem:[%s259 + $0x3c] sm:$0xf]
    %s276 = scalar_lea.vmem %s2, 2
    %v277 = vld [vmem:[%s276] sm:$0x1]
    %v278 = vpack.c.bf16 %v258, %v258
    %v280 = vlaneseq
    %v281 = vshrl.u32 %v280, 7
    %v282 = vsub.s32 0, %v281
    %v283 = vrot.slane %v277, %v282
    %v301 = vunpack.c.l.b16 %v260
    %v302 = vunpack.c.l.b16 %v261
    %v303 = vunpack.c.l.b16 %v262
    %v304 = vunpack.c.l.b16 %v263
    %v305 = vunpack.c.l.b16 %v264
    %v306 = vunpack.c.l.b16 %v265
    %v307 = vunpack.c.l.b16 %v266
    %v308 = vunpack.c.l.b16 %v267
    %v309 = vunpack.c.l.b16 %v268
    %v310 = vunpack.c.l.b16 %v269
    %v311 = vunpack.c.l.b16 %v270
    %v312 = vunpack.c.l.b16 %v271
    %v313 = vunpack.c.l.b16 %v272
    %v314 = vunpack.c.l.b16 %v273
    %v315 = vunpack.c.l.b16 %v274
    %v316 = vunpack.c.l.b16 %v275
    %v317 = vpack.c.b16 %v302, %v301
    %v318 = vpack.c.b16 %v304, %v303
    %v319 = vpack.c.b16 %v306, %v305
    %v320 = vpack.c.b16 %v308, %v307
    %v321 = vpack.c.b16 %v310, %v309
    %v322 = vpack.c.b16 %v312, %v311
    %v323 = vpack.c.b16 %v314, %v313
    %v324 = vpack.c.b16 %v316, %v315
    %333 = vmatprep.subr.bf16.mxu0 0
    %334 = vmatpush1.bf16.msra.mxu0 %v317
    %335 = vmatprep.subr.bf16.mxu0 0
    %336 = vmatpush1.bf16.msra.mxu0 %v318
    %337 = vmatprep.subr.bf16.mxu0 0
    %338 = vmatpush1.bf16.msra.mxu0 %v319
    %339 = vmatprep.subr.bf16.mxu0 0
    %340 = vmatpush1.bf16.msra.mxu0 %v320
    %341 = vmatprep.subr.bf16.mxu0 0
    %342 = vmatpush1.bf16.msra.mxu0 %v321
    %343 = vmatprep.subr.bf16.mxu0 0
    %344 = vmatpush1.bf16.msra.mxu0 %v322
    %345 = vmatprep.subr.bf16.mxu0 0
    %346 = vmatpush1.bf16.msra.mxu0 %v323
    %347 = vmatprep.subr.bf16.mxu0 0
    %348 = vmatpush1.bf16.msra.mxu0 %v324
    %349 = vmatprep.subr.bf16.mxu0 0
    %350 = vmatpush1.bf16.msra.mxu0 0
    %351 = vmatprep.subr.bf16.mxu0 0
    %352 = vmatpush1.bf16.msra.mxu0 0
    %353 = vmatprep.subr.bf16.mxu0 0
    %354 = vmatpush1.bf16.msra.mxu0 0
    %355 = vmatprep.subr.bf16.mxu0 0
    %356 = vmatpush1.bf16.msra.mxu0 0
    %357 = vmatprep.subr.bf16.mxu0 0
    %358 = vmatpush1.bf16.msra.mxu0 0
    %359 = vmatprep.subr.bf16.mxu0 0
    %360 = vmatpush1.bf16.msra.mxu0 0
    %361 = vmatprep.subr.bf16.mxu0 0
    %362 = vmatpush1.bf16.msra.mxu0 0
    %363 = vmatprep.subr.bf16.mxu0 0
    %364 = vmatpush1.bf16.msra.mxu0 0
    %365 = vmatprep.mubr.bf16.mxu0 0
    %366 = vmatmul.mubr.bf16.gmra.mrb[0].mxu0 %v278
    %v367 = vpop.f32.mrb[0].mxu0
    %v368 = vadd.f32 %v283, %v367
    %v369 = vpop.f32.mrb[0].mxu0
    %v370 = vpop.f32.mrb[0].mxu0
    %v371 = vpop.f32.mrb[0].mxu0
    %372 = vdwg.mxu0
    %v373 = vmax.f32 %v368, 0.0
    %s374 = scalar_lea.vmem [#allocation2], 192
    %v375 = vld [vmem:[%s374] sm:$0xf]
    %v376 = vld [vmem:[%s374 + $0x4] sm:$0xf]
    %v377 = vld [vmem:[%s374 + $0x8] sm:$0xf]
    %v378 = vld [vmem:[%s374 + $0xc] sm:$0xf]
    %v379 = vld [vmem:[%s374 + $0x10] sm:$0xf]
    %v380 = vld [vmem:[%s374 + $0x14] sm:$0xf]
    %v381 = vld [vmem:[%s374 + $0x18] sm:$0xf]
    %v382 = vld [vmem:[%s374 + $0x1c] sm:$0xf]
    %v383 = vld [vmem:[%s374 + $0x20] sm:$0xf]
    %v384 = vld [vmem:[%s374 + $0x24] sm:$0xf]
    %v385 = vld [vmem:[%s374 + $0x28] sm:$0xf]
    %v386 = vld [vmem:[%s374 + $0x2c] sm:$0xf]
    %v387 = vld [vmem:[%s374 + $0x30] sm:$0xf]
    %v388 = vld [vmem:[%s374 + $0x34] sm:$0xf]
    %v389 = vld [vmem:[%s374 + $0x38] sm:$0xf]
    %v390 = vld [vmem:[%s374 + $0x3c] sm:$0xf]
    %s391 = scalar_lea.vmem %s2, 3
    %v392 = vld [vmem:[%s391] sm:$0x1]
    %v393 = vpack.c.bf16 %v373, %v373
    %v395 = vlaneseq
    %v396 = vshrl.u32 %v395, 7
    %v397 = vsub.s32 0, %v396
    %v398 = vrot.slane %v392, %v397
    %v416 = vunpack.c.l.b16 %v375
    %v417 = vunpack.c.l.b16 %v376
    %v418 = vunpack.c.l.b16 %v377
    %v419 = vunpack.c.l.b16 %v378
    %v420 = vunpack.c.l.b16 %v379
    %v421 = vunpack.c.l.b16 %v380
    %v422 = vunpack.c.l.b16 %v381
    %v423 = vunpack.c.l.b16 %v382
    %v424 = vunpack.c.l.b16 %v383
    %v425 = vunpack.c.l.b16 %v384
    %v426 = vunpack.c.l.b16 %v385
    %v427 = vunpack.c.l.b16 %v386
    %v428 = vunpack.c.l.b16 %v387
    %v429 = vunpack.c.l.b16 %v388
    %v430 = vunpack.c.l.b16 %v389
    %v431 = vunpack.c.l.b16 %v390
    %v432 = vpack.c.b16 %v417, %v416
    %v433 = vpack.c.b16 %v419, %v418
    %v434 = vpack.c.b16 %v421, %v420
    %v435 = vpack.c.b16 %v423, %v422
    %v436 = vpack.c.b16 %v425, %v424
    %v437 = vpack.c.b16 %v427, %v426
    %v438 = vpack.c.b16 %v429, %v428
    %v439 = vpack.c.b16 %v431, %v430
    %448 = vmatprep.subr.bf16.mxu0 0
    %449 = vmatpush1.bf16.msra.mxu0 %v432
    %450 = vmatprep.subr.bf16.mxu0 0
    %451 = vmatpush1.bf16.msra.mxu0 %v433
    %452 = vmatprep.subr.bf16.mxu0 0
    %453 = vmatpush1.bf16.msra.mxu0 %v434
    %454 = vmatprep.subr.bf16.mxu0 0
    %455 = vmatpush1.bf16.msra.mxu0 %v435
    %456 = vmatprep.subr.bf16.mxu0 0
    %457 = vmatpush1.bf16.msra.mxu0 %v436
    %458 = vmatprep.subr.bf16.mxu0 0
    %459 = vmatpush1.bf16.msra.mxu0 %v437
    %460 = vmatprep.subr.bf16.mxu0 0
    %461 = vmatpush1.bf16.msra.mxu0 %v438
    %462 = vmatprep.subr.bf16.mxu0 0
    %463 = vmatpush1.bf16.msra.mxu0 %v439
    %464 = vmatprep.subr.bf16.mxu0 0
    %465 = vmatpush1.bf16.msra.mxu0 0
    %466 = vmatprep.subr.bf16.mxu0 0
    %467 = vmatpush1.bf16.msra.mxu0 0
    %468 = vmatprep.subr.bf16.mxu0 0
    %469 = vmatpush1.bf16.msra.mxu0 0
    %470 = vmatprep.subr.bf16.mxu0 0
    %471 = vmatpush1.bf16.msra.mxu0 0
    %472 = vmatprep.subr.bf16.mxu0 0
    %473 = vmatpush1.bf16.msra.mxu0 0
    %474 = vmatprep.subr.bf16.mxu0 0
    %475 = vmatpush1.bf16.msra.mxu0 0
    %476 = vmatprep.subr.bf16.mxu0 0
    %477 = vmatpush1.bf16.msra.mxu0 0
    %478 = vmatprep.subr.bf16.mxu0 0
    %479 = vmatpush1.bf16.msra.mxu0 0
    %480 = vmatprep.mubr.bf16.mxu0 0
    %481 = vmatmul.mubr.bf16.gmra.mrb[0].mxu0 %v393
    %v482 = vpop.f32.mrb[0].mxu0
    %v483 = vadd.f32 %v398, %v482
    %v484 = vpop.f32.mrb[0].mxu0
    %v485 = vpop.f32.mrb[0].mxu0
    %v486 = vpop.f32.mrb[0].mxu0
    %487 = vdwg.mxu0
    %488 = vst [vmem:[#allocation5] sm:$0xff] %v483
    // Predicated region
    $region18: #{mlp_forward.1} parent=1 // pred_check
      _
    $region19: #{mlp_forward.1} parent=1 // pred_check_branch
      %490 = sbr.rel (0) target = $region21
    $region20: #{mlp_forward.1} parent=1 // pred_region
      %s492 = ssub.s32 128, 128
      %493 = vsyncadd [#allocation4], %s492
      %s495 = sshll.u32 [#allocation5], 4
      %s496 = int_to_ptr.vmem [resolvable:$true] %s495
      %498 = dma.vmem_to_hbm [thread:$0]  %s496, 128, %s3, [#allocation4]
    $region21: #{mlp_forward.1} parent=1 // pred_fallthru
      _
    // Predicated region
    $region22: #{mlp_forward.1} parent=1 // pred_check
      _
    $region23: #{mlp_forward.1} parent=1 // pred_check_branch
      %500 = sbr.rel (0) target = $region25
    $region24: #{mlp_forward.1} parent=1 // pred_region
      %501 = dma.done [#allocation4], 128
    $region25: #{mlp_forward.1} parent=1 // pred_fallthru
      _
    %502 = vsyncpa [#allocation3], 1
    %503 = vsyncpa [#allocation4], 1

// kernel: mlp_forward.1
$region0: #{mlp_forward.1}
  #allocation0 [shape = 'u32[]', space=smem, size = 0x4, offset = 0x4, fixed_abs, tag = 'smem constant byte address 0x4 - core index']
  #allocation1 [shape = 'u32[144,128]{1,0:T(1,128)}', space=vmem, size = 0x12000, scoped, tag = 'internal scratch']
  %s0 = inlined_call_operand.vmem [shape: f32[8,128], index: 0, kind: input, shape index: {}]
  %s1 = inlined_call_operand.hbm [shape: bf16[4,128,128], index: 1, kind: input, shape index: {}]
  %s2 = inlined_call_operand.vmem [shape: f32[4,1,128], index: 2, kind: input, shape index: {}]
  %s3 = inlined_call_operand.hbm [shape: f32[8,128], index: 3, kind: output, shape index: {}]
  %s4 = sld [smem:[#allocation0]]
  $region26: #{mlp_forward.1} parent=0
    _
  %s6 = ssub.s32 1, %s4
  %s7 = scalar_select 0, %s6, %s4
  $region1: #{mlp_forward.1} parent=0
    #allocation2 [shape = 'u8[131072]{0}', space=vmem, size = 0x20000, scoped, tag = 'input window, operand 1, single buffered']
    #allocation3 [shape = 's32[1]{0}', space=sflag, size = 0x4, scoped, tag = 'scoped memory for mlp_forward.1']
    #allocation4 [shape = 's32[1]{0}', space=sflag, size = 0x4, scoped, tag = 'scoped memory for mlp_forward.1']
    #allocation5 [shape = 'u8[4096]{0}', space=vmem, size = 0x1000, scoped, tag = 'output window, operand 0, single buffered']
    %8 = vsyncpa [#allocation3], 0
    %9 = vsyncpa [#allocation4], 0
    // Predicated region
    $region2: #{mlp_forward.1} parent=1 // pred_check
      _
    $region3: #{mlp_forward.1} parent=1 // pred_check_branch
      %11 = sbr.rel (0) target = $region5
    $region4: #{mlp_forward.1} parent=1 // pred_region
      _
    $region5: #{mlp_forward.1} parent=1 // pred_fallthru
      _
    // Predicated region
    $region6: #{mlp_forward.1} parent=1 // pred_check
      _
    $region7: #{mlp_forward.1} parent=1 // pred_check_branch
      %13 = sbr.rel (0) target = $region9
    $region8: #{mlp_forward.1} parent=1 // pred_region
      %s15 = ssub.s32 4096, 4096
      %16 = vsyncadd [#allocation3], %s15
      %s17 = sshll.u32 [#allocation2], 4
      %s18 = int_to_ptr.vmem [resolvable:$true] %s17
      %23 = dma.hbm_to_vmem [thread:$0]  %s1, 4096, %s18, [#allocation3], 64, 64, 4
    $region9: #{mlp_forward.1} parent=1 // pred_fallthru
      _
    // Predicated region
    $region10: #{mlp_forward.1} parent=1 // pred_check
      _
    $region11: #{mlp_forward.1} parent=1 // pred_check_branch
      %25 = sbr.rel (0) target = $region13
    $region12: #{mlp_forward.1} parent=1 // pred_region
      _
    $region13: #{mlp_forward.1} parent=1 // pred_fallthru
      _
    // Predicated region
    $region14: #{mlp_forward.1} parent=1 // pred_check
      _
    $region15: #{mlp_forward.1} parent=1 // pred_check_branch
      %27 = sbr.rel (0) target = $region17
    $region16: #{mlp_forward.1} parent=1 // pred_region
      %28 = dma.done [#allocation3], 4096
    $region17: #{mlp_forward.1} parent=1 // pred_fallthru
      _
    %v30 = vld [vmem:[%s0] sm:$0xff]
    %v31 = vld [vmem:[#allocation2] sm:$0xf]
    %v32 = vld [vmem:[#allocation2 + $0x4] sm:$0xf]
    %v33 = vld [vmem:[#allocation2 + $0x8] sm:$0xf]
    %v34 = vld [vmem:[#allocation2 + $0xc] sm:$0xf]
    %v35 = vld [vmem:[#allocation2 + $0x10] sm:$0xf]
    %v36 = vld [vmem:[#allocation2 + $0x14] sm:$0xf]
    %v37 = vld [vmem:[#allocation2 + $0x18] sm:$0xf]
    %v38 = vld [vmem:[#allocation2 + $0x1c] sm:$0xf]
    %v39 = vld [vmem:[#allocation2 + $0x20] sm:$0xf]
    %v40 = vld [vmem:[#allocation2 + $0x24] sm:$0xf]
    %v41 = vld [vmem:[#allocation2 + $0x28] sm:$0xf]
    %v42 = vld [vmem:[#allocation2 + $0x2c] sm:$0xf]
    %v43 = vld [vmem:[#allocation2 + $0x30] sm:$0xf]
    %v44 = vld [vmem:[#allocation2 + $0x34] sm:$0xf]
    %v45 = vld [vmem:[#allocation2 + $0x38] sm:$0xf]
    %v46 = vld [vmem:[#allocation2 + $0x3c] sm:$0xf]
    %v47 = vld [vmem:[%s2] sm:$0x1]
    %v48 = vpack.c.bf16 %v30, %v30
    %v50 = vlaneseq
    %v51 = vshrl.u32 %v50, 7
    %v52 = vsub.s32 0, %v51
    %v53 = vrot.slane %v47, %v52
    %v71 = vunpack.c.l.b16 %v31
    %v72 = vunpack.c.l.b16 %v32
    %v73 = vunpack.c.l.b16 %v33
    %v74 = vunpack.c.l.b16 %v34
    %v75 = vunpack.c.l.b16 %v35
    %v76 = vunpack.c.l.b16 %v36
    %v77 = vunpack.c.l.b16 %v37
    %v78 = vunpack.c.l.b16 %v38
    %v79 = vunpack.c.l.b16 %v39
    %v80 = vunpack.c.l.b16 %v40
    %v81 = vunpack.c.l.b16 %v41
    %v82 = vunpack.c.l.b16 %v42
    %v83 = vunpack.c.l.b16 %v43
    %v84 = vunpack.c.l.b16 %v44
    %v85 = vunpack.c.l.b16 %v45
    %v86 = vunpack.c.l.b16 %v46
    %v87 = vpack.c.b16 %v72, %v71
    %v88 = vpack.c.b16 %v74, %v73
    %v89 = vpack.c.b16 %v76, %v75
    %v90 = vpack.c.b16 %v78, %v77
    %v91 = vpack.c.b16 %v80, %v79
    %v92 = vpack.c.b16 %v82, %v81
    %v93 = vpack.c.b16 %v84, %v83
    %v94 = vpack.c.b16 %v86, %v85
    %103 = vmatprep.subr.bf16.mxu0 0
    %104 = vmatpush1.bf16.msra.mxu0 %v87
    %105 = vmatprep.subr.bf16.mxu0 0
    %106 = vmatpush1.bf16.msra.mxu0 %v88
    %107 = vmatprep.subr.bf16.mxu0 0
    %108 = vmatpush1.bf16.msra.mxu0 %v89
    %109 = vmatprep.subr.bf16.mxu0 0
    %110 = vmatpush1.bf16.msra.mxu0 %v90
    %111 = vmatprep.subr.bf16.mxu0 0
    %112 = vmatpush1.bf16.msra.mxu0 %v91
    %113 = vmatprep.subr.bf16.mxu0 0
    %114 = vmatpush1.bf16.msra.mxu0 %v92
    %115 = vmatprep.subr.bf16.mxu0 0
    %116 = vmatpush1.bf16.msra.mxu0 %v93
    %117 = vmatprep.subr.bf16.mxu0 0
    %118 = vmatpush1.bf16.msra.mxu0 %v94
    %119 = vmatprep.subr.bf16.mxu0 0
    %120 = vmatpush1.bf16.msra.mxu0 0
    %121 = vmatprep.subr.bf16.mxu0 0
    %122 = vmatpush1.bf16.msra.mxu0 0
    %123 = vmatprep.subr.bf16.mxu0 0
    %124 = vmatpush1.bf16.msra.mxu0 0
    %125 = vmatprep.subr.bf16.mxu0 0
    %126 = vmatpush1.bf16.msra.mxu0 0
    %127 = vmatprep.subr.bf16.mxu0 0
    %128 = vmatpush1.bf16.msra.mxu0 0
    %129 = vmatprep.subr.bf16.mxu0 0
    %130 = vmatpush1.bf16.msra.mxu0 0
    %131 = vmatprep.subr.bf16.mxu0 0
    %132 = vmatpush1.bf16.msra.mxu0 0
    %133 = vmatprep.subr.bf16.mxu0 0
    %134 = vmatpush1.bf16.msra.mxu0 0
    %135 = vmatprep.mubr.bf16.mxu0 0
    %136 = vmatmul.mubr.bf16.gmra.mrb[0].mxu0 %v48
    %v137 = vpop.f32.mrb[0].mxu0
    %v138 = vadd.f32 %v53, %v137
    %v139 = vpop.f32.mrb[0].mxu0
    %v140 = vpop.f32.mrb[0].mxu0
    %v141 = vpop.f32.mrb[0].mxu0
    %142 = vdwg.mxu0
    %v143 = vmax.f32 %v138, 0.0
    %s144 = scalar_lea.vmem [#allocation2], 64
    %v145 = vld [vmem:[%s144] sm:$0xf]
    %v146 = vld [vmem:[%s144 + $0x4] sm:$0xf]
    %v147 = vld [vmem:[%s144 + $0x8] sm:$0xf]
    %v148 = vld [vmem:[%s144 + $0xc] sm:$0xf]
    %v149 = vld [vmem:[%s144 + $0x10] sm:$0xf]
    %v150 = vld [vmem:[%s144 + $0x14] sm:$0xf]
    %v151 = vld [vmem:[%s144 + $0x18] sm:$0xf]
    %v152 = vld [vmem:[%s144 + $0x1c] sm:$0xf]
    %v153 = vld [vmem:[%s144 + $0x20] sm:$0xf]
    %v154 = vld [vmem:[%s144 + $0x24] sm:$0xf]
    %v155 = vld [vmem:[%s144 + $0x28] sm:$0xf]
    %v156 = vld [vmem:[%s144 + $0x2c] sm:$0xf]
    %v157 = vld [vmem:[%s144 + $0x30] sm:$0xf]
    %v158 = vld [vmem:[%s144 + $0x34] sm:$0xf]
    %v159 = vld [vmem:[%s144 + $0x38] sm:$0xf]
    %v160 = vld [vmem:[%s144 + $0x3c] sm:$0xf]
    %s161 = scalar_lea.vmem %s2, 1
    %v162 = vld [vmem:[%s161] sm:$0x1]
    %v163 = vpack.c.bf16 %v143, %v143
    %v165 = vlaneseq
    %v166 = vshrl.u32 %v165, 7
    %v167 = vsub.s32 0, %v166
    %v168 = vrot.slane %v162, %v167
    %v186 = vunpack.c.l.b16 %v145
    %v187 = vunpack.c.l.b16 %v146
    %v188 = vunpack.c.l.b16 %v147
    %v189 = vunpack.c.l.b16 %v148
    %v190 = vunpack.c.l.b16 %v149
    %v191 = vunpack.c.l.b16 %v150
    %v192 = vunpack.c.l.b16 %v151
    %v193 = vunpack.c.l.b16 %v152
    %v194 = vunpack.c.l.b16 %v153
    %v195 = vunpack.c.l.b16 %v154
    %v196 = vunpack.c.l.b16 %v155
    %v197 = vunpack.c.l.b16 %v156
    %v198 = vunpack.c.l.b16 %v157
    %v199 = vunpack.c.l.b16 %v158
    %v200 = vunpack.c.l.b16 %v159
    %v201 = vunpack.c.l.b16 %v160
    %v202 = vpack.c.b16 %v187, %v186
    %v203 = vpack.c.b16 %v189, %v188
    %v204 = vpack.c.b16 %v191, %v190
    %v205 = vpack.c.b16 %v193, %v192
    %v206 = vpack.c.b16 %v195, %v194
    %v207 = vpack.c.b16 %v197, %v196
    %v208 = vpack.c.b16 %v199, %v198
    %v209 = vpack.c.b16 %v201, %v200
    %218 = vmatprep.subr.bf16.mxu0 0
    %219 = vmatpush1.bf16.msra.mxu0 %v202
    %220 = vmatprep.subr.bf16.mxu0 0
    %221 = vmatpush1.bf16.msra.mxu0 %v203
    %222 = vmatprep.subr.bf16.mxu0 0
    %223 = vmatpush1.bf16.msra.mxu0 %v204
    %224 = vmatprep.subr.bf16.mxu0 0
    %225 = vmatpush1.bf16.msra.mxu0 %v205
    %226 = vmatprep.subr.bf16.mxu0 0
    %227 = vmatpush1.bf16.msra.mxu0 %v206
    %228 = vmatprep.subr.bf16.mxu0 0
    %229 = vmatpush1.bf16.msra.mxu0 %v207
    %230 = vmatprep.subr.bf16.mxu0 0
    %231 = vmatpush1.bf16.msra.mxu0 %v208
    %232 = vmatprep.subr.bf16.mxu0 0
    %233 = vmatpush1.bf16.msra.mxu0 %v209
    %234 = vmatprep.subr.bf16.mxu0 0
    %235 = vmatpush1.bf16.msra.mxu0 0
    %236 = vmatprep.subr.bf16.mxu0 0
    %237 = vmatpush1.bf16.msra.mxu0 0
    %238 = vmatprep.subr.bf16.mxu0 0
    %239 = vmatpush1.bf16.msra.mxu0 0
    %240 = vmatprep.subr.bf16.mxu0 0
    %241 = vmatpush1.bf16.msra.mxu0 0
    %242 = vmatprep.subr.bf16.mxu0 0
    %243 = vmatpush1.bf16.msra.mxu0 0
    %244 = vmatprep.subr.bf16.mxu0 0
    %245 = vmatpush1.bf16.msra.mxu0 0
    %246 = vmatprep.subr.bf16.mxu0 0
    %247 = vmatpush1.bf16.msra.mxu0 0
    %248 = vmatprep.subr.bf16.mxu0 0
    %249 = vmatpush1.bf16.msra.mxu0 0
    %250 = vmatprep.mubr.bf16.mxu0 0
    %251 = vmatmul.mubr.bf16.gmra.mrb[0].mxu0 %v163
    %v252 = vpop.f32.mrb[0].mxu0
    %v253 = vadd.f32 %v168, %v252
    %v254 = vpop.f32.mrb[0].mxu0
    %v255 = vpop.f32.mrb[0].mxu0
    %v256 = vpop.f32.mrb[0].mxu0
    %257 = vdwg.mxu0
    %v258 = vmax.f32 %v253, 0.0
    %s259 = scalar_lea.vmem [#allocation2], 128
    %v260 = vld [vmem:[%s259] sm:$0xf]
    %v261 = vld [vmem:[%s259 + $0x4] sm:$0xf]
    %v262 = vld [vmem:[%s259 + $0x8] sm:$0xf]
    %v263 = vld [vmem:[%s259 + $0xc] sm:$0xf]
    %v264 = vld [vmem:[%s259 + $0x10] sm:$0xf]
    %v265 = vld [vmem:[%s259 + $0x14] sm:$0xf]
    %v266 = vld [vmem:[%s259 + $0x18] sm:$0xf]
    %v267 = vld [vmem:[%s259 + $0x1c] sm:$0xf]
    %v268 = vld [vmem:[%s259 + $0x20] sm:$0xf]
    %v269 = vld [vmem:[%s259 + $0x24] sm:$0xf]
    %v270 = vld [vmem:[%s259 + $0x28] sm:$0xf]
    %v271 = vld [vmem:[%s259 + $0x2c] sm:$0xf]
    %v272 = vld [vmem:[%s259 + $0x30] sm:$0xf]
    %v273 = vld [vmem:[%s259 + $0x34] sm:$0xf]
    %v274 = vld [vmem:[%s259 + $0x38] sm:$0xf]
    %v275 = vld [vmem:[%s259 + $0x3c] sm:$0xf]
    %s276 = scalar_lea.vmem %s2, 2
    %v277 = vld [vmem:[%s276] sm:$0x1]
    %v278 = vpack.c.bf16 %v258, %v258
    %v280 = vlaneseq
    %v281 = vshrl.u32 %v280, 7
    %v282 = vsub.s32 0, %v281
    %v283 = vrot.slane %v277, %v282
    %v301 = vunpack.c.l.b16 %v260
    %v302 = vunpack.c.l.b16 %v261
    %v303 = vunpack.c.l.b16 %v262
    %v304 = vunpack.c.l.b16 %v263
    %v305 = vunpack.c.l.b16 %v264
    %v306 = vunpack.c.l.b16 %v265
    %v307 = vunpack.c.l.b16 %v266
    %v308 = vunpack.c.l.b16 %v267
    %v309 = vunpack.c.l.b16 %v268
    %v310 = vunpack.c.l.b16 %v269
    %v311 = vunpack.c.l.b16 %v270
    %v312 = vunpack.c.l.b16 %v271
    %v313 = vunpack.c.l.b16 %v272
    %v314 = vunpack.c.l.b16 %v273
    %v315 = vunpack.c.l.b16 %v274
    %v316 = vunpack.c.l.b16 %v275
    %v317 = vpack.c.b16 %v302, %v301
    %v318 = vpack.c.b16 %v304, %v303
    %v319 = vpack.c.b16 %v306, %v305
    %v320 = vpack.c.b16 %v308, %v307
    %v321 = vpack.c.b16 %v310, %v309
    %v322 = vpack.c.b16 %v312, %v311
    %v323 = vpack.c.b16 %v314, %v313
    %v324 = vpack.c.b16 %v316, %v315
    %333 = vmatprep.subr.bf16.mxu0 0
    %334 = vmatpush1.bf16.msra.mxu0 %v317
    %335 = vmatprep.subr.bf16.mxu0 0
    %336 = vmatpush1.bf16.msra.mxu0 %v318
    %337 = vmatprep.subr.bf16.mxu0 0
    %338 = vmatpush1.bf16.msra.mxu0 %v319
    %339 = vmatprep.subr.bf16.mxu0 0
    %340 = vmatpush1.bf16.msra.mxu0 %v320
    %341 = vmatprep.subr.bf16.mxu0 0
    %342 = vmatpush1.bf16.msra.mxu0 %v321
    %343 = vmatprep.subr.bf16.mxu0 0
    %344 = vmatpush1.bf16.msra.mxu0 %v322
    %345 = vmatprep.subr.bf16.mxu0 0
    %346 = vmatpush1.bf16.msra.mxu0 %v323
    %347 = vmatprep.subr.bf16.mxu0 0
    %348 = vmatpush1.bf16.msra.mxu0 %v324
    %349 = vmatprep.subr.bf16.mxu0 0
    %350 = vmatpush1.bf16.msra.mxu0 0
    %351 = vmatprep.subr.bf16.mxu0 0
    %352 = vmatpush1.bf16.msra.mxu0 0
    %353 = vmatprep.subr.bf16.mxu0 0
    %354 = vmatpush1.bf16.msra.mxu0 0
    %355 = vmatprep.subr.bf16.mxu0 0
    %356 = vmatpush1.bf16.msra.mxu0 0
    %357 = vmatprep.subr.bf16.mxu0 0
    %358 = vmatpush1.bf16.msra.mxu0 0
    %359 = vmatprep.subr.bf16.mxu0 0
    %360 = vmatpush1.bf16.msra.mxu0 0
    %361 = vmatprep.subr.bf16.mxu0 0
    %362 = vmatpush1.bf16.msra.mxu0 0
    %363 = vmatprep.subr.bf16.mxu0 0
    %364 = vmatpush1.bf16.msra.mxu0 0
    %365 = vmatprep.mubr.bf16.mxu0 0
    %366 = vmatmul.mubr.bf16.gmra.mrb[0].mxu0 %v278
    %v367 = vpop.f32.mrb[0].mxu0
    %v368 = vadd.f32 %v283, %v367
    %v369 = vpop.f32.mrb[0].mxu0
    %v370 = vpop.f32.mrb[0].mxu0
    %v371 = vpop.f32.mrb[0].mxu0
    %372 = vdwg.mxu0
    %v373 = vmax.f32 %v368, 0.0
    %s374 = scalar_lea.vmem [#allocation2], 192
    %v375 = vld [vmem:[%s374] sm:$0xf]
    %v376 = vld [vmem:[%s374 + $0x4] sm:$0xf]
    %v377 = vld [vmem:[%s374 + $0x8] sm:$0xf]
    %v378 = vld [vmem:[%s374 + $0xc] sm:$0xf]
    %v379 = vld [vmem:[%s374 + $0x10] sm:$0xf]
    %v380 = vld [vmem:[%s374 + $0x14] sm:$0xf]
    %v381 = vld [vmem:[%s374 + $0x18] sm:$0xf]
    %v382 = vld [vmem:[%s374 + $0x1c] sm:$0xf]
    %v383 = vld [vmem:[%s374 + $0x20] sm:$0xf]
    %v384 = vld [vmem:[%s374 + $0x24] sm:$0xf]
    %v385 = vld [vmem:[%s374 + $0x28] sm:$0xf]
    %v386 = vld [vmem:[%s374 + $0x2c] sm:$0xf]
    %v387 = vld [vmem:[%s374 + $0x30] sm:$0xf]
    %v388 = vld [vmem:[%s374 + $0x34] sm:$0xf]
    %v389 = vld [vmem:[%s374 + $0x38] sm:$0xf]
    %v390 = vld [vmem:[%s374 + $0x3c] sm:$0xf]
    %s391 = scalar_lea.vmem %s2, 3
    %v392 = vld [vmem:[%s391] sm:$0x1]
    %v393 = vpack.c.bf16 %v373, %v373
    %v395 = vlaneseq
    %v396 = vshrl.u32 %v395, 7
    %v397 = vsub.s32 0, %v396
    %v398 = vrot.slane %v392, %v397
    %v416 = vunpack.c.l.b16 %v375
    %v417 = vunpack.c.l.b16 %v376
    %v418 = vunpack.c.l.b16 %v377
    %v419 = vunpack.c.l.b16 %v378
    %v420 = vunpack.c.l.b16 %v379
    %v421 = vunpack.c.l.b16 %v380
    %v422 = vunpack.c.l.b16 %v381
    %v423 = vunpack.c.l.b16 %v382
    %v424 = vunpack.c.l.b16 %v383
    %v425 = vunpack.c.l.b16 %v384
    %v426 = vunpack.c.l.b16 %v385
    %v427 = vunpack.c.l.b16 %v386
    %v428 = vunpack.c.l.b16 %v387
    %v429 = vunpack.c.l.b16 %v388
    %v430 = vunpack.c.l.b16 %v389
    %v431 = vunpack.c.l.b16 %v390
    %v432 = vpack.c.b16 %v417, %v416
    %v433 = vpack.c.b16 %v419, %v418
    %v434 = vpack.c.b16 %v421, %v420
    %v435 = vpack.c.b16 %v423, %v422
    %v436 = vpack.c.b16 %v425, %v424
    %v437 = vpack.c.b16 %v427, %v426
    %v438 = vpack.c.b16 %v429, %v428
    %v439 = vpack.c.b16 %v431, %v430
    %448 = vmatprep.subr.bf16.mxu0 0
    %449 = vmatpush1.bf16.msra.mxu0 %v432
    %450 = vmatprep.subr.bf16.mxu0 0
    %451 = vmatpush1.bf16.msra.mxu0 %v433
    %452 = vmatprep.subr.bf16.mxu0 0
    %453 = vmatpush1.bf16.msra.mxu0 %v434
    %454 = vmatprep.subr.bf16.mxu0 0
    %455 = vmatpush1.bf16.msra.mxu0 %v435
    %456 = vmatprep.subr.bf16.mxu0 0
    %457 = vmatpush1.bf16.msra.mxu0 %v436
    %458 = vmatprep.subr.bf16.mxu0 0
    %459 = vmatpush1.bf16.msra.mxu0 %v437
    %460 = vmatprep.subr.bf16.mxu0 0
    %461 = vmatpush1.bf16.msra.mxu0 %v438
    %462 = vmatprep.subr.bf16.mxu0 0
    %463 = vmatpush1.bf16.msra.mxu0 %v439
    %464 = vmatprep.subr.bf16.mxu0 0
    %465 = vmatpush1.bf16.msra.mxu0 0
    %466 = vmatprep.subr.bf16.mxu0 0
    %467 = vmatpush1.bf16.msra.mxu0 0
    %468 = vmatprep.subr.bf16.mxu0 0
    %469 = vmatpush1.bf16.msra.mxu0 0
    %470 = vmatprep.subr.bf16.mxu0 0
    %471 = vmatpush1.bf16.msra.mxu0 0
    %472 = vmatprep.subr.bf16.mxu0 0
    %473 = vmatpush1.bf16.msra.mxu0 0
    %474 = vmatprep.subr.bf16.mxu0 0
    %475 = vmatpush1.bf16.msra.mxu0 0
    %476 = vmatprep.subr.bf16.mxu0 0
    %477 = vmatpush1.bf16.msra.mxu0 0
    %478 = vmatprep.subr.bf16.mxu0 0
    %479 = vmatpush1.bf16.msra.mxu0 0
    %480 = vmatprep.mubr.bf16.mxu0 0
    %481 = vmatmul.mubr.bf16.gmra.mrb[0].mxu0 %v393
    %v482 = vpop.f32.mrb[0].mxu0
    %v483 = vadd.f32 %v398, %v482
    %v484 = vpop.f32.mrb[0].mxu0
    %v485 = vpop.f32.mrb[0].mxu0
    %v486 = vpop.f32.mrb[0].mxu0
    %487 = vdwg.mxu0
    %488 = vst [vmem:[#allocation5] sm:$0xff] %v483
    // Predicated region
    $region18: #{mlp_forward.1} parent=1 // pred_check
      _
    $region19: #{mlp_forward.1} parent=1 // pred_check_branch
      %490 = sbr.rel (0) target = $region21
    $region20: #{mlp_forward.1} parent=1 // pred_region
      %s492 = ssub.s32 128, 128
      %493 = vsyncadd [#allocation4], %s492
      %s495 = sshll.u32 [#allocation5], 4
      %s496 = int_to_ptr.vmem [resolvable:$true] %s495
      %498 = dma.vmem_to_hbm [thread:$0]  %s496, 128, %s3, [#allocation4]
    $region21: #{mlp_forward.1} parent=1 // pred_fallthru
      _
    // Predicated region
    $region22: #{mlp_forward.1} parent=1 // pred_check
      _
    $region23: #{mlp_forward.1} parent=1 // pred_check_branch
      %500 = sbr.rel (0) target = $region25
    $region24: #{mlp_forward.1} parent=1 // pred_region
      %501 = dma.done [#allocation4], 128
    $region25: #{mlp_forward.1} parent=1 // pred_fallthru
      _
    %502 = vsyncpa [#allocation3], 1
    %503 = vsyncpa [#allocation4], 1

</llo_original>
